<compile_context>
chip_gen: v7x
topology: tpu7x:2x2x1
jax: 0.10.0
libtpu: 0.0.40
codegen_flags: <defaults>
</compile_context>

<pallas_src>
import functools

import jax
import jax.numpy as jnp
from jax.experimental import pallas as pl
from jax.experimental.pallas import tpu as pltpu


def _pad_to(w, m=128):
    return ((w + m - 1) // m) * m


def _compiler_params(parallel_axes=0):
    # Per-generation VMEM limit: ~3/4 of physical, capped at 100 MiB
    # (=> ~48 MiB on v7x, ~96-100 MiB on v5e/v6e).
    try:
        cap = int(pltpu.get_tpu_info().vmem_capacity_bytes)
    except Exception:  # pragma: no cover - fallback if the query is unavailable
        cap = 128 * 1024 * 1024
    limit = min((cap * 3) // 4, 100 * 1024 * 1024)
    kwargs = dict(vmem_limit_bytes=limit)
    if parallel_axes:
        kwargs["dimension_semantics"] = ("parallel",) * parallel_axes
    return pltpu.CompilerParams(**kwargs)


def _softmax_last_exact(x):
    m = jnp.max(x, axis=-1, keepdims=True)
    e = jnp.exp(x - m)
    return e / jnp.sum(e, axis=-1, keepdims=True)


# ----------------------------- weight slab packing -----------------------------

_PARAM_NAMES = (
    "dec_w1v", "dec_w1t", "dec_b1", "dec_w2", "dec_b2",
    "ev_w1v", "ev_w1t", "ev_b1", "ev_w2", "ev_b2",
    "ec_w1", "ec_b1", "ec_w2", "ec_b2",
    "ca_wv", "ca_bv",
    "g1_w", "g1_dst", "g1_srcT", "g1_b",
    "g2_w", "g2_dst", "g2_srcT", "g2_b",
    "vm_wz", "vm_wt", "vm_b",
    "vlv_wz", "vlv_wt", "vlv_b",
    "hid_w", "hid_b", "vs_w", "vs_b", "cs_w", "cs_b", "ct_w", "ct_b",
)


def _pack_params(p):
    """Pack every 2-D param into one (rows, 128) f32 slab; 8-row aligned blocks."""
    blocks, offsets, r = [], {}, 0
    for name in _PARAM_NAMES:
        a = jnp.asarray(p[name], jnp.float32)
        fi, fo = a.shape
        pad_r = (-fi) % 8
        blocks.append(jnp.pad(a, ((0, pad_r), (0, 128 - fo))))
        offsets[name] = (r, fi, fo)
        r += fi + pad_r
    return jnp.concatenate(blocks, axis=0), offsets


# ----------------------------- Kernel A: preprocess -----------------------------

def _preprocess_kernel(vis_ref, cdx_ref, ct_ref, mean_ref, slab_ref, node_out,
                       *, offsets, eps, node_pad):
    def W(name):
        r0, fi, fo = offsets[name]
        return slab_ref[r0:r0 + fi, 0:fo]

    vis = vis_ref[...]
    cdx = cdx_ref[...]
    m = vis.shape[0]

    vis_lib = jnp.log1p(jnp.sum(vis, axis=-1, keepdims=True))
    cdx_lib = jnp.log1p(jnp.sum(cdx, axis=-1, keepdims=True))

    # deconvolution MLP on [log1p(visium), cell_type]; concat replaced by split matmuls
    lv = jnp.log1p(vis)
    h = jnp.maximum(
        jnp.dot(lv, W("dec_w1v"), preferred_element_type=jnp.float32)
        + jnp.dot(ct_ref[...], W("dec_w1t"), preferred_element_type=jnp.float32)
        + W("dec_b1"), 0.0)
    logit = jnp.dot(h, W("dec_w2"), preferred_element_type=jnp.float32) + W("dec_b2")
    deconv = _softmax_last_exact(logit)            # returned (q_xi_m) -> exact

    # NegBinom mean
    nb_mu = jnp.exp(vis_lib / mean_ref[...]) * deconv + eps

    parts = [vis_lib, cdx_lib, deconv, nb_mu]
    if node_pad:
        parts.append(jnp.zeros((m, node_pad), jnp.float32))
    node_out[...] = jnp.concatenate(parts, axis=-1)


# ----------------------------- Kernel B: encoders + GAT + decoder -----------------------------

def _main_kernel(qxi_ref, cdx_ref, ct_ref, vlib_ref, clib_ref, adj_ref,
                 znoise_ref, vnoise_ref, agg_ref, slab_ref,
                 node_out, agg_out, attn_out, *,
                 offsets, eps, latent_dim, hidden_channels, v_dim,
                 node_pad, agg_pad, attn_pad):
    n = qxi_ref.shape[0]
    L, HC = latent_dim, hidden_channels

    def W(name):
        r0, fi, fo = offsets[name]
        return slab_ref[r0:r0 + fi, 0:fo]

    # int8 adjacency -> masks (cast once; bool concat avoided by concatenating f32)
    adjf = adj_ref[...].astype(jnp.float32)
    mask1 = adjf > 0.0                                              # (n, n)
    mask4 = jnp.concatenate([adjf, adjf, adjf, adjf], axis=1) > 0.0  # (n, 4n)
    ct = ct_ref[...]

    def gat_multi(xs, wn, dstn, srcTn, bn, heads, fout, concat, mask_p, approx,
                  attn_ref=None, attn_col0=0):
        # Dense GATConv (torch_geometric semantics; eval mode => attention dropout no-op).
        # Inputs sharing weights/adjacency are row-stacked so x@W and the attention-logit
        # matmuls run once; logits for all heads are packed along lanes as (n, heads*n).
        Wg, Adst, AsrcT, bg = W(wn), W(dstn), W(srcTn), W(bn)
        x_all = xs[0] if len(xs) == 1 else jnp.concatenate(xs, axis=0)
        h_all = jnp.dot(x_all, Wg, preferred_element_type=jnp.float32)       # (B*n, H*F)
        e_dst_all = jnp.dot(h_all, Adst, preferred_element_type=jnp.float32)  # (B*n, H)
        e_src_all = jax.lax.dot_general(AsrcT, h_all, (((1,), (1,)), ((), ())),
                                        preferred_element_type=jnp.float32)   # (H, B*n)
        results = []
        for b in range(len(xs)):
            h = h_all[b * n:(b + 1) * n]
            e_dst = e_dst_all[b * n:(b + 1) * n]                   # (n, H)
            e_src = e_src_all[:, b * n:(b + 1) * n]                # (H, n)
            # packed logits: [i, hd*n + j] = e_dst[i, hd] + e_src[hd, j]  (target i, source j)
            e_dst_rep = jnp.concatenate(
                [jnp.broadcast_to(e_dst[:, hd:hd + 1], (n, n)) for hd in range(heads)], axis=1)
            e_src_flat = jnp.concatenate(
                [e_src[hd:hd + 1, :] for hd in range(heads)], axis=1)
            logits = e_dst_rep + e_src_flat
            logits = jnp.maximum(logits, 0.2 * logits)             # LeakyReLU(0.2)
            logits = jnp.where(mask_p, logits, -1e30)
            m_h = [jnp.max(logits[:, hd * n:(hd + 1) * n], axis=-1, keepdims=True)
                   for hd in range(heads)]
            m_rep = jnp.concatenate(
                [jnp.broadcast_to(m_h[hd], (n, n)) for hd in range(heads)], axis=1)
            p = jnp.exp(logits - m_rep)                            # masked entries -> 0
            outs = []
            for hd in range(heads):
                p_h = p[:, hd * n:(hd + 1) * n]
                s_h = jnp.sum(p_h, axis=-1, keepdims=True)
                if approx:
                    alpha = p_h * pl.reciprocal(s_h, approx=True)  # internal only
                else:
                    alpha = p_h / s_h                              # returned -> exact
                if attn_ref is not None:
                    # immediate store: shortest possible alpha liveness
                    attn_ref[:, attn_col0 + hd * n:attn_col0 + (hd + 1) * n] = alpha
                outs.append(jnp.dot(alpha, h[:, hd * fout:(hd + 1) * fout],
                                    preferred_element_type=jnp.float32))
            if concat:
                out = jnp.concatenate(outs, axis=-1)
            else:
                out = outs[0]
                for t in outs[1:]:
                    out = out + t
                out = out * (1.0 / heads)
            results.append(out + bg)
        return results

    # ----- encoders -----
    xv = jnp.log1p(qxi_ref[...])
    xc = jnp.log1p(cdx_ref[...])
    hv = jnp.maximum(
        jnp.dot(xv, W("ev_w1v"), preferred_element_type=jnp.float32)
        + jnp.dot(ct, W("ev_w1t"), preferred_element_type=jnp.float32)
        + W("ev_b1"), 0.0)
    visium_h = jnp.dot(hv, W("ev_w2"), preferred_element_type=jnp.float32) + W("ev_b2")
    hc = jnp.maximum(
        jnp.dot(xc, W("ec_w1"), preferred_element_type=jnp.float32) + W("ec_b1"), 0.0)
    codex_h = jnp.dot(hc, W("ec_w2"), preferred_element_type=jnp.float32) + W("ec_b2")
    visium_mu, visium_logvar = visium_h[:, :L], visium_h[:, L:]
    codex_mu, codex_logvar = codex_h[:, :L], codex_h[:, L:]

    # ----- encoder GAT stacks, batched across modalities (alphas never written to HBM) -----
    r1 = gat_multi([visium_mu, codex_mu], "g1_w", "g1_dst", "g1_srcT", "g1_b",
                   4, HC, True, mask4, approx=True)
    v1 = jnp.maximum(r1[0], 0.0)
    c1 = jnp.maximum(r1[1], 0.0)
    r2 = gat_multi([v1, c1], "g2_w", "g2_dst", "g2_srcT", "g2_b",
                   1, L, False, mask1, approx=True)
    vm_g, cm_g = r2[0], r2[1]

    # ----- cross attention -----
    # softmax over a length-1 sequence == 1, so only the shared value projection matters;
    # averaging then projecting equals projecting the average (same module both calls).
    combined_mu = jnp.dot(0.5 * (vm_g + cm_g), W("ca_wv"),
                          preferred_element_type=jnp.float32) + W("ca_bv")
    combined_logvar = jnp.dot(0.5 * (visium_logvar + codex_logvar), W("ca_wv"),
                              preferred_element_type=jnp.float32) + W("ca_bv")

    # reparameterize
    z = combined_mu + znoise_ref[...] * jnp.exp(0.5 * combined_logvar)

    # ----- infer_v (the valid call; see wrapper note) -----
    v_m = (jnp.dot(z, W("vm_wz"), preferred_element_type=jnp.float32)
           + jnp.dot(ct, W("vm_wt"), preferred_element_type=jnp.float32) + W("vm_b"))
    v_logvar = (jnp.dot(z, W("vlv_wz"), preferred_element_type=jnp.float32)
                + jnp.dot(ct, W("vlv_wt"), preferred_element_type=jnp.float32) + W("vlv_b"))
    v = v_m + vnoise_ref[...] * jnp.exp(0.5 * v_logvar)

    # ----- decoder GAT stack (returned alphas -> exact softmax, stored immediately) -----
    z1 = jnp.maximum(
        gat_multi([z], "g1_w", "g1_dst", "g1_srcT", "g1_b", 4, HC, True, mask4,
                  approx=False, attn_ref=attn_out, attn_col0=0)[0], 0.0)
    z2 = gat_multi([z1], "g2_w", "g2_dst", "g2_srcT", "g2_b", 1, L, False, mask1,
                   approx=False, attn_ref=attn_out, attn_col0=4 * n)[0]
    if attn_pad:
        attn_out[:, 5 * n:] = jnp.zeros((n, attn_pad), jnp.float32)

    # ----- decoder heads -----
    hidden = jnp.maximum(
        jnp.dot(z2, W("hid_w"), preferred_element_type=jnp.float32) + W("hid_b"), 0.0)
    visium_scale = _softmax_last_exact(
        jnp.dot(hidden, W("vs_w"), preferred_element_type=jnp.float32) + W("vs_b"))
    visium_rate = visium_scale * jnp.exp(vlib_ref[...]) + eps
    codex_scale = _softmax_last_exact(
        jnp.dot(hidden, W("cs_w"), preferred_element_type=jnp.float32) + W("cs_b"))
    codex_rate = codex_scale * jnp.exp(clib_ref[...]) + eps
    gen_ct = jnp.dot(z2, W("ct_w"), preferred_element_type=jnp.float32) + W("ct_b")

    # per-spot mean of visium_rate as a matmul against the normalized spot one-hot (lane-padded)
    agg = jnp.dot(agg_ref[...], visium_rate, preferred_element_type=jnp.float32)
    if agg_pad:
        agg = jnp.concatenate(
            [agg, jnp.zeros((agg_ref.shape[0], agg_pad), jnp.float32)], axis=-1)
    agg_out[...] = agg

    # lane-dense per-node output slab (single dense store)
    node_parts = [z2, combined_mu, combined_logvar, v, v_m, v_logvar,
                  visium_rate, codex_rate, gen_ct]
    if node_pad:
        node_parts.append(jnp.zeros((n, node_pad), jnp.float32))
    node_out[...] = jnp.concatenate(node_parts, axis=-1)


# ----------------------------- parameters -----------------------------

def _lin_init(key, fi, fo, scale=0.1):
    kw, kb = jax.random.split(key)
    w = jax.random.normal(kw, (fi, fo), jnp.float32) * scale
    b = jax.random.normal(kb, (fo,), jnp.float32) * 0.01
    return w, b.reshape(1, fo)


def _att_blocks(key, heads, fout):
    # Block-diagonal attention matrices so per-head e_src / e_dst logits come from one
    # matmul per orientation.
    ks, kd = jax.random.split(key)
    att_src = jax.random.normal(ks, (heads, fout), jnp.float32) * 0.1
    att_dst = jax.random.normal(kd, (heads, fout), jnp.float32) * 0.1
    dst_blk = jnp.zeros((heads * fout, heads), jnp.float32)
    srcT_blk = jnp.zeros((heads, heads * fout), jnp.float32)
    for h in range(heads):
        dst_blk = dst_blk.at[h * fout:(h + 1) * fout, h].set(att_dst[h])
        srcT_blk = srcT_blk.at[h, h * fout:(h + 1) * fout].set(att_src[h])
    return dst_blk, srcT_blk


def init_params(key, visium_dim, codex_dim, cell_type_dim, latent_dim, hidden_channels, v_dim):
    keys = jax.random.split(key, 24)
    p = {}
    # deconvolution MLP
    w, b = _lin_init(keys[0], visium_dim + cell_type_dim, 128)
    p["dec_w1v"], p["dec_w1t"], p["dec_b1"] = w[:visium_dim], w[visium_dim:], b
    p["dec_w2"], p["dec_b2"] = _lin_init(keys[1], 128, visium_dim)
    # encoders
    w, b = _lin_init(keys[2], visium_dim + cell_type_dim, 128)
    p["ev_w1v"], p["ev_w1t"], p["ev_b1"] = w[:visium_dim], w[visium_dim:], b
    p["ev_w2"], p["ev_b2"] = _lin_init(keys[3], 128, latent_dim * 2)
    p["ec_w1"], p["ec_b1"] = _lin_init(keys[4], codex_dim, 128)
    p["ec_w2"], p["ec_b2"] = _lin_init(keys[5], 128, latent_dim * 2)
    # cross attention: only the value projection affects the length-1 output
    p["ca_wv"], p["ca_bv"] = _lin_init(keys[6], latent_dim, latent_dim)
    # GAT layers
    p["g1_w"] = jax.random.normal(keys[7], (latent_dim, 4 * hidden_channels), jnp.float32) * 0.1
    p["g1_dst"], p["g1_srcT"] = _att_blocks(keys[8], 4, hidden_channels)
    p["g1_b"] = jnp.zeros((1, 4 * hidden_channels), jnp.float32)
    p["g2_w"] = jax.random.normal(keys[9], (4 * hidden_channels, latent_dim), jnp.float32) * 0.1
    p["g2_dst"], p["g2_srcT"] = _att_blocks(keys[10], 1, latent_dim)
    p["g2_b"] = jnp.zeros((1, latent_dim), jnp.float32)
    # infer_v layers (concat input split into two matmuls)
    w, b = _lin_init(keys[11], latent_dim + cell_type_dim, v_dim)
    p["vm_wz"], p["vm_wt"], p["vm_b"] = w[:latent_dim], w[latent_dim:], b
    w, b = _lin_init(keys[12], latent_dim + cell_type_dim, v_dim)
    p["vlv_wz"], p["vlv_wt"], p["vlv_b"] = w[:latent_dim], w[latent_dim:], b
    # decoder heads
    p["hid_w"], p["hid_b"] = _lin_init(keys[13], latent_dim, 128)
    p["vs_w"], p["vs_b"] = _lin_init(keys[14], 128, visium_dim)
    p["cs_w"], p["cs_b"] = _lin_init(keys[15], 128, codex_dim)
    p["ct_w"], p["ct_b"] = _lin_init(keys[16], latent_dim, cell_type_dim)
    # dispersion parameters
    p["_px_r"] = jax.random.normal(keys[17], (1, visium_dim), jnp.float32)
    p["_px_r_sc"] = jax.random.normal(keys[18], (1, visium_dim), jnp.float32)
    p["_py_r"] = jax.random.normal(keys[19], (1, codex_dim), jnp.float32)
    return p


# ----------------------------- forward -----------------------------

def coral_forward(p, x, edge_index, cell_type, spot_indices, visium_spot, rng, *,
                  visium_dim, codex_dim, cell_type_dim, latent_dim, hidden_channels,
                  v_dim, eps=1e-10):
    n = x.shape[0]
    s = visium_spot.shape[0]
    visium_x = x[:, :visium_dim]
    codex_x = x[:, visium_dim:]

    # int8 adjacency with self loops; edge_index[0]=source, edge_index[1]=target
    adj = jnp.zeros((n, n), jnp.int8).at[edge_index[1], edge_index[0]].set(1)
    adj = adj.at[jnp.arange(n), jnp.arange(n)].set(1)

    spot_onehot = (spot_indices[None, :] == visium_spot[:, None]).astype(jnp.float32)  # (S, N)
    counts = jnp.sum(spot_onehot, axis=1)
    # TODO(synk): torch computed mean_num in float64; float32 here.
    mean_num = jnp.mean(counts)
    agg_mat = spot_onehot / jnp.maximum(counts[:, None], 1.0)

    slab, offsets = _pack_params(p)

    # gene-level dispersions (tiny; plain JAX so Kernel A stays purely row-parallel)
    px_r = jax.nn.softplus(p["_px_r"][0]) + eps
    px_r_sc = jax.nn.softplus(p["_px_r_sc"][0]) + eps
    py_r = jax.nn.softplus(p["_py_r"][0]) + eps

    # ---------------- kernel A: preprocess (row grid, parallel) ----------------
    node_w_a = 2 + 2 * visium_dim
    node_wa_pad = _pad_to(node_w_a)
    rows_blk = n if n <= 512 else 512
    grid_a = (pl.cdiv(n, rows_blk),)

    node_a = pl.pallas_call(
        functools.partial(_preprocess_kernel, offsets=offsets, eps=eps,
                          node_pad=node_wa_pad - node_w_a),
        out_shape=jax.ShapeDtypeStruct((n, node_wa_pad), jnp.float32),
        grid=grid_a,
        in_specs=[pl.BlockSpec((rows_blk, visium_dim), lambda i: (i, 0)),
                  pl.BlockSpec((rows_blk, codex_dim), lambda i: (i, 0)),
                  pl.BlockSpec((rows_blk, cell_type_dim), lambda i: (i, 0)),
                  pl.BlockSpec((1, 1), lambda i: (0, 0)),
                  pl.BlockSpec(slab.shape, lambda i: (0, 0))],
        out_specs=pl.BlockSpec((rows_blk, node_wa_pad), lambda i: (i, 0)),
        compiler_params=_compiler_params(parallel_axes=1),
    )(visium_x, codex_x, cell_type, mean_num.reshape(1, 1), slab)

    visium_library = node_a[:, 0:1]
    codex_library = node_a[:, 1:2]
    deconv_x = node_a[:, 2:2 + visium_dim]
    nb_mu = node_a[:, 2 + visium_dim:2 + 2 * visium_dim]

    # TODO(synk): Gamma/Poisson (NegBinom) sampling has no Pallas equivalent; jax.random glue.
    nb_eps = 1e-5
    theta = jnp.exp(px_r_sc)
    conc = jnp.broadcast_to(theta + nb_eps, nb_mu.shape)
    gamma_rate = conc / (nb_mu + nb_eps)
    k_g, k_p, k_z, k_v = jax.random.split(rng, 4)
    lam = jax.random.gamma(k_g, conc) / gamma_rate
    q_xi = jax.random.poisson(k_p, lam).astype(jnp.float32)

    z_noise = jax.random.normal(k_z, (n, latent_dim), jnp.float32)
    v_noise = jax.random.normal(k_v, (n, v_dim), jnp.float32)

    # ---------------- kernel B: encoders + GATs + decoder (single block at toy N) ----------------
    node_w_b = 3 * latent_dim + 3 * v_dim + visium_dim + codex_dim + cell_type_dim
    node_wb_pad = _pad_to(node_w_b)
    attn_w = _pad_to(5 * n)
    agg_w = _pad_to(visium_dim)

    main_inputs = [q_xi, codex_x, cell_type, visium_library, codex_library, adj,
                   z_noise, v_noise, agg_mat, slab]
    vspec = lambda: pl.BlockSpec(memory_space=pltpu.MemorySpace.VMEM)

    node_b, agg_padded, attn_slab = pl.pallas_call(
        functools.partial(_main_kernel, offsets=offsets, eps=eps,
                          latent_dim=latent_dim, hidden_channels=hidden_channels,
                          v_dim=v_dim, node_pad=node_wb_pad - node_w_b,
                          agg_pad=agg_w - visium_dim, attn_pad=attn_w - 5 * n),
        out_shape=(jax.ShapeDtypeStruct((n, node_wb_pad), jnp.float32),
                   jax.ShapeDtypeStruct((s, agg_w), jnp.float32),
                   jax.ShapeDtypeStruct((n, attn_w), jnp.float32)),
        in_specs=[vspec() for _ in main_inputs],
        out_specs=(vspec(), vspec(), vspec()),
        compiler_params=_compiler_params(),
    )(*main_inputs)

    # slice the lane-dense slabs back into named outputs
    o = 0
    z2 = node_b[:, o:o + latent_dim]; o += latent_dim
    z_mu = node_b[:, o:o + latent_dim]; o += latent_dim
    z_logvar = node_b[:, o:o + latent_dim]; o += latent_dim
    v = node_b[:, o:o + v_dim]; o += v_dim
    v_m = node_b[:, o:o + v_dim]; o += v_dim
    v_logvar = node_b[:, o:o + v_dim]; o += v_dim
    visium_rate = node_b[:, o:o + visium_dim]; o += visium_dim
    codex_rate = node_b[:, o:o + codex_dim]; o += codex_dim
    generated_cell_type = node_b[:, o:o + cell_type_dim]; o += cell_type_dim

    aggregated_visium = agg_padded[:, :visium_dim]
    attn_weights_1 = jnp.stack([attn_slab[:, hd * n:(hd + 1) * n] for hd in range(4)], axis=0)
    attn_weights_2 = attn_slab[:, 4 * n:5 * n][None]

    # NOTE: the original forward first calls self.infer_v(x_combined, z, cell_type), which is a
    # TypeError in PyTorch (infer_v takes (z, cell_type)); only the valid call is reproduced.
    return {
        "pxi_rate": visium_rate,
        "px_rate_aggregated": aggregated_visium,
        "px_r": px_r,
        "py_rate": codex_rate,
        "py_r": py_r,
        "z_mu": z_mu,
        "z_logvar": z_logvar,
        "z": z2,
        "generated_cell_type": generated_cell_type,
        "px_r_sc": px_r_sc,
        "q_xi_m": deconv_x,
        "q_xi": q_xi,
        "v": v,
        "v_m": v_m,
        "v_logvar": v_logvar,
        "edge_index": edge_index,
        "attn_weights_1": attn_weights_1,
        "attn_weights_2": attn_weights_2,
    }


if __name__ == "__main__":
    visium_dim, codex_dim, cell_type_dim = 12, 10, 6
    latent_dim, hidden_channels, v_dim = 16, 8, 8
    n_cells, n_spots, n_edges = 16, 4, 40

    key = jax.random.PRNGKey(0)
    k_param, k_x, k_ct, k_e1, k_e2, k_rng = jax.random.split(key, 6)
    params = init_params(k_param, visium_dim, codex_dim, cell_type_dim,
                         latent_dim, hidden_channels, v_dim)

    x = jax.random.uniform(k_x, (n_cells, visium_dim + codex_dim), jnp.float32, 0.0, 5.0)
    cell_type = jax.nn.one_hot(
        jax.random.randint(k_ct, (n_cells,), 0, cell_type_dim), cell_type_dim,
        dtype=jnp.float32)
    src = jax.random.randint(k_e1, (n_edges,), 0, n_cells)
    dst = jax.random.randint(k_e2, (n_edges,), 0, n_cells)
    edge_index = jnp.stack([src, dst], axis=0)
    spot_indices = jnp.arange(n_cells, dtype=jnp.int32) % n_spots
    visium_spot = jnp.arange(n_spots, dtype=jnp.int32)

    out = coral_forward(params, x, edge_index, cell_type, spot_indices, visium_spot,
                        k_rng, visium_dim=visium_dim, codex_dim=codex_dim,
                        cell_type_dim=cell_type_dim, latent_dim=latent_dim,
                        hidden_channels=hidden_channels, v_dim=v_dim)
    jax.block_until_ready(out)
    print("KERNEL_OK")
</pallas_src>

<mosaic_0001>
module attributes {stable_mosaic.version = 11 : i64} {
  func.func @_preprocess_kernel(%arg0: i32, %arg1: memref<16x12xf32, #tpu.memory_space<vmem>>, %arg2: memref<16x10xf32, #tpu.memory_space<vmem>>, %arg3: memref<16x6xf32, #tpu.memory_space<vmem>>, %arg4: memref<1x1xf32, #tpu.memory_space<vmem>>, %arg5: memref<1032x128xf32, #tpu.memory_space<vmem>>, %arg6: memref<16x128xf32, #tpu.memory_space<vmem>>) attributes {dimension_semantics = [#tpu.dimension_semantics<parallel>], iteration_bounds = array<i64: 1>, scalar_prefetch = 0 : i64, scratch_operands = 0 : i64, tpu.core_type = #tpu.core_type<tc>, window_params = [{transform_indices = @transform_0, window_bounds = array<i64: 16, 12>}, {transform_indices = @transform_1, window_bounds = array<i64: 16, 10>}, {transform_indices = @transform_2, window_bounds = array<i64: 16, 6>}, {pipeline_mode = #tpu.pipeline_mode<synchronous>, transform_indices = @transform_3, window_bounds = array<i64: 1, 1>}, {pipeline_mode = #tpu.pipeline_mode<synchronous>, transform_indices = @transform_4, window_bounds = array<i64: 1032, 128>}, {transform_indices = @transform_5, window_bounds = array<i64: 16, 128>}]} {
    %c0 = arith.constant 0 : index
    %c0_0 = arith.constant 0 : index
    %0 = vector.load %arg1[%c0, %c0_0] : memref<16x12xf32, #tpu.memory_space<vmem>>, vector<16x12xf32>
    %c0_1 = arith.constant 0 : index
    %c0_2 = arith.constant 0 : index
    %1 = vector.load %arg2[%c0_1, %c0_2] : memref<16x10xf32, #tpu.memory_space<vmem>>, vector<16x10xf32>
    %cst = arith.constant dense<0.000000e+00> : vector<16xf32>
    %2 = vector.multi_reduction <add>, %0, %cst [1] : vector<16x12xf32> to vector<16xf32>
    %3 = vector.shape_cast %2 : vector<16xf32> to vector<16x1xf32>
    %4 = math.log1p %3 : vector<16x1xf32>
    %cst_3 = arith.constant dense<0.000000e+00> : vector<16xf32>
    %5 = vector.multi_reduction <add>, %1, %cst_3 [1] : vector<16x10xf32> to vector<16xf32>
    %6 = vector.shape_cast %5 : vector<16xf32> to vector<16x1xf32>
    %7 = math.log1p %6 : vector<16x1xf32>
    %8 = math.log1p %0 : vector<16x12xf32>
    %c0_4 = arith.constant 0 : index
    %c0_5 = arith.constant 0 : index
    %9 = vector.load %arg5[%c0_4, %c0_5] : memref<1032x128xf32, #tpu.memory_space<vmem>>, vector<12x128xf32>
    %cst_6 = arith.constant dense<0.000000e+00> : vector<16x128xf32>
    %10 = tpu.matmul %8, %9, %cst_6 {dimension_numbers = #tpu.dot_dimension_numbers<[1], [0], [0], [1], [0, 0, 1, 1], [], []>} : vector<16x12xf32>, vector<12x128xf32>, vector<16x128xf32> -> vector<16x128xf32>
    %c0_7 = arith.constant 0 : index
    %c0_8 = arith.constant 0 : index
    %11 = vector.load %arg3[%c0_7, %c0_8] : memref<16x6xf32, #tpu.memory_space<vmem>>, vector<16x6xf32>
    %c16 = arith.constant 16 : index
    %c0_9 = arith.constant 0 : index
    %12 = vector.load %arg5[%c16, %c0_9] : memref<1032x128xf32, #tpu.memory_space<vmem>>, vector<6x128xf32>
    %cst_10 = arith.constant dense<0.000000e+00> : vector<16x128xf32>
    %13 = tpu.matmul %11, %12, %cst_10 {dimension_numbers = #tpu.dot_dimension_numbers<[1], [0], [0], [1], [0, 0, 1, 1], [], []>} : vector<16x6xf32>, vector<6x128xf32>, vector<16x128xf32> -> vector<16x128xf32>
    %14 = arith.addf %10, %13 : vector<16x128xf32>
    %c24 = arith.constant 24 : index
    %c0_11 = arith.constant 0 : index
    %15 = vector.load %arg5[%c24, %c0_11] : memref<1032x128xf32, #tpu.memory_space<vmem>>, vector<1x128xf32>
    %16 = vector.broadcast %15 : vector<1x128xf32> to vector<16x128xf32>
    %17 = arith.addf %14, %16 : vector<16x128xf32>
    %cst_12 = arith.constant 0.000000e+00 : f32
    %18 = vector.broadcast %cst_12 : f32 to vector<16x128xf32>
    %19 = arith.maximumf %17, %18 : vector<16x128xf32>
    %c32 = arith.constant 32 : index
    %c0_13 = arith.constant 0 : index
    %20 = vector.load %arg5[%c32, %c0_13] : memref<1032x128xf32, #tpu.memory_space<vmem>>, vector<128x12xf32>
    %cst_14 = arith.constant dense<0.000000e+00> : vector<16x12xf32>
    %21 = tpu.matmul %19, %20, %cst_14 {dimension_numbers = #tpu.dot_dimension_numbers<[1], [0], [0], [1], [0, 0, 1, 1], [], []>} : vector<16x128xf32>, vector<128x12xf32>, vector<16x12xf32> -> vector<16x12xf32>
    %c160 = arith.constant 160 : index
    %c0_15 = arith.constant 0 : index
    %22 = vector.load %arg5[%c160, %c0_15] : memref<1032x128xf32, #tpu.memory_space<vmem>>, vector<1x12xf32>
    %23 = vector.broadcast %22 : vector<1x12xf32> to vector<16x12xf32>
    %24 = arith.addf %21, %23 : vector<16x12xf32>
    %cst_16 = arith.constant dense<0xFF800000> : vector<16xf32>
    %25 = vector.multi_reduction <maximumf>, %24, %cst_16 [1] : vector<16x12xf32> to vector<16xf32>
    %26 = vector.shape_cast %25 : vector<16xf32> to vector<16x1xf32>
    %27 = vector.broadcast %26 : vector<16x1xf32> to vector<16x12xf32>
    %28 = arith.subf %24, %27 : vector<16x12xf32>
    %29 = math.exp %28 : vector<16x12xf32>
    %cst_17 = arith.constant dense<0.000000e+00> : vector<16xf32>
    %30 = vector.multi_reduction <add>, %29, %cst_17 [1] : vector<16x12xf32> to vector<16xf32>
    %31 = vector.shape_cast %30 : vector<16xf32> to vector<16x1xf32>
    %32 = vector.broadcast %31 : vector<16x1xf32> to vector<16x12xf32>
    %33 = arith.divf %29, %32 : vector<16x12xf32>
    %c0_18 = arith.constant 0 : index
    %c0_19 = arith.constant 0 : index
    %34 = vector.load %arg4[%c0_18, %c0_19] : memref<1x1xf32, #tpu.memory_space<vmem>>, vector<1x1xf32>
    %35 = vector.broadcast %34 : vector<1x1xf32> to vector<16x1xf32>
    %36 = arith.divf %4, %35 : vector<16x1xf32>
    %37 = math.exp %36 : vector<16x1xf32>
    %38 = vector.broadcast %37 : vector<16x1xf32> to vector<16x12xf32>
    %39 = arith.mulf %38, %33 : vector<16x12xf32>
    %cst_20 = arith.constant 1.000000e-10 : f32
    %40 = vector.broadcast %cst_20 : f32 to vector<16x12xf32>
    %41 = arith.addf %39, %40 : vector<16x12xf32>
    %cst_21 = arith.constant 0.000000e+00 : f32
    %42 = vector.broadcast %cst_21 : f32 to vector<16x102xf32>
    %43 = tpu.concatenate %4, %7, %33, %41, %42 in 1 : vector<16x1xf32>, vector<16x1xf32>, vector<16x12xf32>, vector<16x12xf32>, vector<16x102xf32> -> vector<16x128xf32>
    %c0_22 = arith.constant 0 : index
    %c0_23 = arith.constant 0 : index
    %44 = vector.load %arg6[%c0_22, %c0_23] : memref<16x128xf32, #tpu.memory_space<vmem>>, vector<16x128xf32>
    tpu.vector_store %arg6[%c0_22, %c0_23], %43 {strides = array<i32>} : memref<16x128xf32, #tpu.memory_space<vmem>>, vector<16x128xf32>,
    return
  }
  func.func @transform_0(%arg0: i32) -> (i32, i32) {
    %c0_i32 = arith.constant 0 : i32
    %c0_i32_0 = arith.constant 0 : i32
    return %arg0, %c0_i32 : i32, i32
  }
  func.func @transform_1(%arg0: i32) -> (i32, i32) {
    %c0_i32 = arith.constant 0 : i32
    %c0_i32_0 = arith.constant 0 : i32
    return %arg0, %c0_i32 : i32, i32
  }
  func.func @transform_2(%arg0: i32) -> (i32, i32) {
    %c0_i32 = arith.constant 0 : i32
    %c0_i32_0 = arith.constant 0 : i32
    return %arg0, %c0_i32 : i32, i32
  }
  func.func @transform_3(%arg0: i32) -> (i32, i32) {
    %c0_i32 = arith.constant 0 : i32
    %c0_i32_0 = arith.constant 0 : i32
    %c0_i32_1 = arith.constant 0 : i32
    return %c0_i32, %c0_i32_0 : i32, i32
  }
  func.func @transform_4(%arg0: i32) -> (i32, i32) {
    %c0_i32 = arith.constant 0 : i32
    %c0_i32_0 = arith.constant 0 : i32
    %c0_i32_1 = arith.constant 0 : i32
    return %c0_i32, %c0_i32_0 : i32, i32
  }
  func.func @transform_5(%arg0: i32) -> (i32, i32) {
    %c0_i32 = arith.constant 0 : i32
    %c0_i32_0 = arith.constant 0 : i32
    return %arg0, %c0_i32 : i32, i32
  }
}

</mosaic_0001>

<llo_original>
// kernel: tpu_custom_call.1
$region0: #{tpu_custom_call.1}
  #allocation0 [shape = 'u32[]', space=smem, size = 0x4, offset = 0x4, fixed_abs, tag = 'smem constant byte address 0x4 - core index']
  #allocation1 [shape = 'u32[144,128]{1,0:T(1,128)}', space=vmem, size = 0x12000, scoped, tag = 'internal scratch']
  #allocation2 [shape = 'f32[1,1]{1,0:T(1,128)S(1)}', space=vmem, size = 0x200, scoped, tag = 'scoped memory for tpu_custom_call.1']
  %s0 = inlined_call_operand.hbm [shape: f32[16,12], index: 0, kind: input, shape index: {}]
  %s1 = inlined_call_operand.hbm [shape: f32[16,10], index: 1, kind: input, shape index: {}]
  %s2 = inlined_call_operand.hbm [shape: f32[16,6], index: 2, kind: input, shape index: {}]
  %s3 = inlined_call_operand.<no memory space> [shape: f32[1,1], index: 3, kind: input, shape index: {}]
  %s4 = inlined_call_operand.hbm [shape: f32[1032,128], index: 4, kind: input, shape index: {}]
  %s5 = inlined_call_operand.hbm [shape: f32[16,128], index: 5, kind: output, shape index: {}]
  %s6 = sld [smem:[#allocation0]]
  $region46: #{tpu_custom_call.1} parent=0
    _
  %s8 = ssub.s32 1, %s6
  %s9 = scalar_select 0, %s8, %s6
  %v10 = vstv %s3
  %11 = vst [vmem:[#allocation2] sm:$0x1] %v10
  $region1: #{tpu_custom_call.1} parent=0
    #allocation3 [shape = 'u8[8192]{0}', space=vmem, size = 0x2000, scoped, tag = 'input window, operand 0, single buffered']
    #allocation4 [shape = 's32[1]{0}', space=sflag, size = 0x4, scoped, tag = 'scoped memory for tpu_custom_call.1']
    #allocation5 [shape = 's32[1]{0}', space=sflag, size = 0x4, scoped, tag = 'scoped memory for tpu_custom_call.1']
    #allocation6 [shape = 'u8[8192]{0}', space=vmem, size = 0x2000, scoped, tag = 'input window, operand 1, single buffered']
    #allocation7 [shape = 's32[1]{0}', space=sflag, size = 0x4, scoped, tag = 'scoped memory for tpu_custom_call.1']
    #allocation8 [shape = 'u8[8192]{0}', space=vmem, size = 0x2000, scoped, tag = 'input window, operand 2, single buffered']
    #allocation9 [shape = 'u8[528384]{0}', space=vmem, size = 0x81000, scoped, tag = 'input window, operand 4, single buffered']
    #allocation10 [shape = 's32[1]{0}', space=sflag, size = 0x4, scoped, tag = 'scoped memory for tpu_custom_call.1']
    #allocation11 [shape = 'u8[8192]{0}', space=vmem, size = 0x2000, scoped, tag = 'output window, operand 0, single buffered']
    %12 = vsyncpa [#allocation4], 0
    %13 = vsyncpa [#allocation7], 0
    %14 = vsyncpa [#allocation10], 0
    %15 = vsyncpa [#allocation5], 0
    // Predicated region
    $region2: #{tpu_custom_call.1} parent=1 // pred_check
      _
    $region3: #{tpu_custom_call.1} parent=1 // pred_check_branch
      %17 = sbr.rel (0) target = $region5
    $region4: #{tpu_custom_call.1} parent=1 // pred_region
      %s19 = ssub.s32 256, 256
      %20 = vsyncadd [#allocation4], %s19
      %s21 = sshll.u32 [#allocation3], 4
      %s22 = int_to_ptr.vmem [resolvable:$true] %s21
      %27 = dma.hbm_to_vmem [thread:$0]  %s0, 256, %s22, [#allocation4], 128, 128, 8
    $region5: #{tpu_custom_call.1} parent=1 // pred_fallthru
      _
    // Predicated region
    $region6: #{tpu_custom_call.1} parent=1 // pred_check
      _
    $region7: #{tpu_custom_call.1} parent=1 // pred_check_branch
      %29 = sbr.rel (0) target = $region9
    $region8: #{tpu_custom_call.1} parent=1 // pred_region
      %s31 = ssub.s32 256, 256
      %32 = vsyncadd [#allocation7], %s31
      %s33 = sshll.u32 [#allocation6], 4
      %s34 = int_to_ptr.vmem [resolvable:$true] %s33
      %39 = dma.hbm_to_vmem [thread:$0]  %s1, 256, %s34, [#allocation7], 128, 128, 8
    $region9: #{tpu_custom_call.1} parent=1 // pred_fallthru
      _
    // Predicated region
    $region10: #{tpu_custom_call.1} parent=1 // pred_check
      _
    $region11: #{tpu_custom_call.1} parent=1 // pred_check_branch
      %41 = sbr.rel (0) target = $region13
    $region12: #{tpu_custom_call.1} parent=1 // pred_region
      %s43 = ssub.s32 256, 256
      %44 = vsyncadd [#allocation7], %s43
      %s45 = sshll.u32 [#allocation8], 4
      %s46 = int_to_ptr.vmem [resolvable:$true] %s45
      %51 = dma.hbm_to_vmem [thread:$0]  %s2, 256, %s46, [#allocation7], 128, 128, 8
    $region13: #{tpu_custom_call.1} parent=1 // pred_fallthru
      _
    // Predicated region
    $region14: #{tpu_custom_call.1} parent=1 // pred_check
      _
    $region15: #{tpu_custom_call.1} parent=1 // pred_check_branch
      %53 = sbr.rel (0) target = $region17
    $region16: #{tpu_custom_call.1} parent=1 // pred_region
      _
    $region17: #{tpu_custom_call.1} parent=1 // pred_fallthru
      _
    // Predicated region
    $region18: #{tpu_custom_call.1} parent=1 // pred_check
      _
    $region19: #{tpu_custom_call.1} parent=1 // pred_check_branch
      %55 = sbr.rel (0) target = $region21
    $region20: #{tpu_custom_call.1} parent=1 // pred_region
      %s57 = ssub.s32 16512, 16512
      %58 = vsyncadd [#allocation10], %s57
      %s59 = sshll.u32 [#allocation9], 4
      %s60 = int_to_ptr.vmem [resolvable:$true] %s59
      %65 = dma.hbm_to_vmem [thread:$0]  %s4, 16512, %s60, [#allocation10], 128, 128, 8
    $region21: #{tpu_custom_call.1} parent=1 // pred_fallthru
      _
    // Predicated region
    $region22: #{tpu_custom_call.1} parent=1 // pred_check
      _
    $region23: #{tpu_custom_call.1} parent=1 // pred_check_branch
      %67 = sbr.rel (0) target = $region25
    $region24: #{tpu_custom_call.1} parent=1 // pred_region
      %68 = dma.done [#allocation4], 256
    $region25: #{tpu_custom_call.1} parent=1 // pred_fallthru
      _
    // Predicated region
    $region26: #{tpu_custom_call.1} parent=1 // pred_check
      _
    $region27: #{tpu_custom_call.1} parent=1 // pred_check_branch
      %70 = sbr.rel (0) target = $region29
    $region28: #{tpu_custom_call.1} parent=1 // pred_region
      %71 = dma.done [#allocation7], 256
    $region29: #{tpu_custom_call.1} parent=1 // pred_fallthru
      _
    // Predicated region
    $region30: #{tpu_custom_call.1} parent=1 // pred_check
      _
    $region31: #{tpu_custom_call.1} parent=1 // pred_check_branch
      %73 = sbr.rel (0) target = $region33
    $region32: #{tpu_custom_call.1} parent=1 // pred_region
      %74 = dma.done [#allocation7], 256
    $region33: #{tpu_custom_call.1} parent=1 // pred_fallthru
      _
    // Predicated region
    $region34: #{tpu_custom_call.1} parent=1 // pred_check
      _
    $region35: #{tpu_custom_call.1} parent=1 // pred_check_branch
      %76 = sbr.rel (0) target = $region37
    $region36: #{tpu_custom_call.1} parent=1 // pred_region
      %77 = dma.done [#allocation10], 16512
    $region37: #{tpu_custom_call.1} parent=1 // pred_fallthru
      _
    %v78 = vld [vmem:[#allocation3] sm:$0xff]
    %v79 = vld [vmem:[#allocation3 + $0x8] sm:$0xff]
    %v80 = vld [vmem:[#allocation6] sm:$0xff]
    %v81 = vld [vmem:[#allocation6 + $0x8] sm:$0xff]
    %vm82 = vcmask 97280
    %v83 = vsel %vm82, %v78, 0.0
    %84 = vadd.xlane.f32.xlu0 %v83
    %v85 = vpop.xlane.xlu0 %84
    %v86 = vsel %vm82, %v79, 0.0
    %87 = vadd.xlane.f32.xlu0 %v86
    %v88 = vpop.xlane.xlu0 %87
    %v89 = vadd.f32 %v85, 1.0
    %v90 = vlog2.pop %v89
    %v91 = vmul.f32 %v90, 0.6931472
    %v92 = vmul.f32 -0.5, %v85
    %v93 = vadd.f32 %v92, 1.0
    %v94 = vmul.f32 %v93, %v85
    %v95 = vand.u32 2147483647, %v85
    %vm96 = vcmp.lt.f32.partialorder %v95, 0.0004427343
    %v97 = vsel %vm96, %v94, %v91
    %v98 = vadd.f32 %v88, 1.0
    %v99 = vlog2.pop %v98
    %v100 = vmul.f32 %v99, 0.6931472
    %v101 = vmul.f32 -0.5, %v88
    %v102 = vadd.f32 %v101, 1.0
    %v103 = vmul.f32 %v102, %v88
    %v104 = vand.u32 2147483647, %v88
    %vm105 = vcmp.lt.f32.partialorder %v104, 0.0004427343
    %v106 = vsel %vm105, %v103, %v100
    %vm107 = vcmask 80896
    %v108 = vsel %vm107, %v80, 0.0
    %109 = vadd.xlane.f32.xlu0 %v108
    %v110 = vpop.xlane.xlu0 %109
    %v111 = vsel %vm107, %v81, 0.0
    %112 = vadd.xlane.f32.xlu0 %v111
    %v113 = vpop.xlane.xlu0 %112
    %v114 = vadd.f32 %v110, 1.0
    %v115 = vlog2.pop %v114
    %v116 = vmul.f32 %v115, 0.6931472
    %v117 = vmul.f32 -0.5, %v110
    %v118 = vadd.f32 %v117, 1.0
    %v119 = vmul.f32 %v118, %v110
    %v120 = vand.u32 2147483647, %v110
    %vm121 = vcmp.lt.f32.partialorder %v120, 0.0004427343
    %v122 = vsel %vm121, %v119, %v116
    %v123 = vadd.f32 %v113, 1.0
    %v124 = vlog2.pop %v123
    %v125 = vmul.f32 %v124, 0.6931472
    %v126 = vmul.f32 -0.5, %v113
    %v127 = vadd.f32 %v126, 1.0
    %v128 = vmul.f32 %v127, %v113
    %v129 = vand.u32 2147483647, %v113
    %vm130 = vcmp.lt.f32.partialorder %v129, 0.0004427343
    %v131 = vsel %vm130, %v128, %v125
    %v132 = vadd.f32 %v78, 1.0
    %v133 = vlog2.pop %v132
    %v134 = vmul.f32 %v133, 0.6931472
    %v135 = vmul.f32 -0.5, %v78
    %v136 = vadd.f32 %v135, 1.0
    %v137 = vmul.f32 %v136, %v78
    %v138 = vand.u32 2147483647, %v78
    %vm139 = vcmp.lt.f32.partialorder %v138, 0.0004427343
    %v140 = vsel %vm139, %v137, %v134
    %v141 = vadd.f32 %v79, 1.0
    %v142 = vlog2.pop %v141
    %v143 = vmul.f32 %v142, 0.6931472
    %v144 = vmul.f32 -0.5, %v79
    %v145 = vadd.f32 %v144, 1.0
    %v146 = vmul.f32 %v145, %v79
    %v147 = vand.u32 2147483647, %v79
    %vm148 = vcmp.lt.f32.partialorder %v147, 0.0004427343
    %v149 = vsel %vm148, %v146, %v143
    %v150 = vld [vmem:[#allocation9] sm:$0xff]
    %v151 = vld [vmem:[#allocation9 + $0x8] sm:$0xf]
    %v152 = vld [vmem:[#allocation8] sm:$0xff]
    %v153 = vld [vmem:[#allocation8 + $0x8] sm:$0xff]
    %v154 = vld [vmem:[#allocation9 + $0x10] sm:$0x3f]
    %vm155 = vcmask 48128
    %v157 = vsel %vm155, %v152, 0
    %v160 = vsel %vm155, %v153, 0
    %vm162 = vcmask 1045504
    %v164 = vsel %vm162, %v154, 0
    %166 = vmatprep.subr.mxu0 0.0
    %167 = vmatpush1.msra.mxu0 %v164
    %168 = vmatprep.subr.mxu0 0.0
    %169 = vmatpush1.msra.mxu0 0.0
    %170 = vmatprep.subr.mxu0 0.0
    %171 = vmatpush1.msra.mxu0 0.0
    %172 = vmatprep.subr.mxu0 0.0
    %173 = vmatpush1.msra.mxu0 0.0
    %174 = vmatprep.subr.mxu0 0.0
    %175 = vmatpush1.msra.mxu0 0.0
    %176 = vmatprep.subr.mxu0 0.0
    %177 = vmatpush1.msra.mxu0 0.0
    %178 = vmatprep.subr.mxu0 0.0
    %179 = vmatpush1.msra.mxu0 0.0
    %180 = vmatprep.subr.mxu0 0.0
    %181 = vmatpush1.msra.mxu0 0.0
    %182 = vmatprep.subr.mxu0 0.0
    %183 = vmatpush1.msra.mxu0 0.0
    %184 = vmatprep.subr.mxu0 0.0
    %185 = vmatpush1.msra.mxu0 0.0
    %186 = vmatprep.subr.mxu0 0.0
    %187 = vmatpush1.msra.mxu0 0.0
    %188 = vmatprep.subr.mxu0 0.0
    %189 = vmatpush1.msra.mxu0 0.0
    %190 = vmatprep.subr.mxu0 0.0
    %191 = vmatpush1.msra.mxu0 0.0
    %192 = vmatprep.subr.mxu0 0.0
    %193 = vmatpush1.msra.mxu0 0.0
    %194 = vmatprep.subr.mxu0 0.0
    %195 = vmatpush1.msra.mxu0 0.0
    %196 = vmatprep.subr.mxu0 0.0
    %197 = vmatpush1.msra.mxu0 0.0
    %198 = vmatprep.subr.mxu0 0.0
    %199 = vmatpush1.msra.mxu0 0.0
    %200 = vmatprep.subr.mxu0 0.0
    %201 = vmatpush1.msra.mxu0 0.0
    %202 = vmatprep.subr.mxu0 0.0
    %203 = vmatpush1.msra.mxu0 0.0
    %204 = vmatprep.subr.mxu0 0.0
    %205 = vmatpush1.msra.mxu0 0.0
    %206 = vmatprep.subr.mxu0 0.0
    %207 = vmatpush1.msra.mxu0 0.0
    %208 = vmatprep.subr.mxu0 0.0
    %209 = vmatpush1.msra.mxu0 0.0
    %210 = vmatprep.subr.mxu0 0.0
    %211 = vmatpush1.msra.mxu0 0.0
    %212 = vmatprep.subr.mxu0 0.0
    %213 = vmatpush1.msra.mxu0 0.0
    %214 = vmatprep.subr.mxu0 0.0
    %215 = vmatpush1.msra.mxu0 0.0
    %216 = vmatprep.subr.mxu0 0.0
    %217 = vmatpush1.msra.mxu0 0.0
    %218 = vmatprep.subr.mxu0 0.0
    %219 = vmatpush1.msra.mxu0 0.0
    %220 = vmatprep.subr.mxu0 0.0
    %221 = vmatpush1.msra.mxu0 0.0
    %222 = vmatprep.subr.mxu0 0.0
    %223 = vmatpush1.msra.mxu0 0.0
    %224 = vmatprep.subr.mxu0 0.0
    %225 = vmatpush1.msra.mxu0 0.0
    %226 = vmatprep.subr.mxu0 0.0
    %227 = vmatpush1.msra.mxu0 0.0
    %228 = vmatprep.subr.mxu0 0.0
    %229 = vmatpush1.msra.mxu0 0.0
    %230 = vmatprep.mubr.f32.mxu0 0.0
    %231 = vmatmul.mubr.f32.gmra.mrb[0].mxu0 %v157
    %v232 = vpop.f32.mrb[0].mxu0
    %v233 = vadd.f32 0.0, %v232
    %v234 = vpop.f32.mrb[0].mxu0
    %235 = vmatprep.mubr.f32.mxu0 0.0
    %236 = vmatmul.mubr.f32.gmra.mrb[0].mxu0 %v160
    %v237 = vpop.f32.mrb[0].mxu0
    %v238 = vadd.f32 0.0, %v237
    %v239 = vpop.f32.mrb[0].mxu0
    %240 = vdwg.mxu0
    %v242 = vsel %vm82, %v140, 0
    %v245 = vsel %vm82, %v149, 0
    %vm247 = vcmask 1043456
    %v249 = vsel %vm247, %v151, 0
    %251 = vmatprep.subr.mxu0 0.0
    %252 = vmatpush1.msra.mxu0 %v150
    %253 = vmatprep.subr.mxu0 0.0
    %254 = vmatpush1.msra.mxu0 %v249
    %255 = vmatprep.subr.mxu0 0.0
    %256 = vmatpush1.msra.mxu0 0.0
    %257 = vmatprep.subr.mxu0 0.0
    %258 = vmatpush1.msra.mxu0 0.0
    %259 = vmatprep.subr.mxu0 0.0
    %260 = vmatpush1.msra.mxu0 0.0
    %261 = vmatprep.subr.mxu0 0.0
    %262 = vmatpush1.msra.mxu0 0.0
    %263 = vmatprep.subr.mxu0 0.0
    %264 = vmatpush1.msra.mxu0 0.0
    %265 = vmatprep.subr.mxu0 0.0
    %266 = vmatpush1.msra.mxu0 0.0
    %267 = vmatprep.subr.mxu0 0.0
    %268 = vmatpush1.msra.mxu0 0.0
    %269 = vmatprep.subr.mxu0 0.0
    %270 = vmatpush1.msra.mxu0 0.0
    %271 = vmatprep.subr.mxu0 0.0
    %272 = vmatpush1.msra.mxu0 0.0
    %273 = vmatprep.subr.mxu0 0.0
    %274 = vmatpush1.msra.mxu0 0.0
    %275 = vmatprep.subr.mxu0 0.0
    %276 = vmatpush1.msra.mxu0 0.0
    %277 = vmatprep.subr.mxu0 0.0
    %278 = vmatpush1.msra.mxu0 0.0
    %279 = vmatprep.subr.mxu0 0.0
    %280 = vmatpush1.msra.mxu0 0.0
    %281 = vmatprep.subr.mxu0 0.0
    %282 = vmatpush1.msra.mxu0 0.0
    %283 = vmatprep.subr.mxu0 0.0
    %284 = vmatpush1.msra.mxu0 0.0
    %285 = vmatprep.subr.mxu0 0.0
    %286 = vmatpush1.msra.mxu0 0.0
    %287 = vmatprep.subr.mxu0 0.0
    %288 = vmatpush1.msra.mxu0 0.0
    %289 = vmatprep.subr.mxu0 0.0
    %290 = vmatpush1.msra.mxu0 0.0
    %291 = vmatprep.subr.mxu0 0.0
    %292 = vmatpush1.msra.mxu0 0.0
    %293 = vmatprep.subr.mxu0 0.0
    %294 = vmatpush1.msra.mxu0 0.0
    %295 = vmatprep.subr.mxu0 0.0
    %296 = vmatpush1.msra.mxu0 0.0
    %297 = vmatprep.subr.mxu0 0.0
    %298 = vmatpush1.msra.mxu0 0.0
    %299 = vmatprep.subr.mxu0 0.0
    %300 = vmatpush1.msra.mxu0 0.0
    %301 = vmatprep.subr.mxu0 0.0
    %302 = vmatpush1.msra.mxu0 0.0
    %303 = vmatprep.subr.mxu0 0.0
    %304 = vmatpush1.msra.mxu0 0.0
    %305 = vmatprep.subr.mxu0 0.0
    %306 = vmatpush1.msra.mxu0 0.0
    %307 = vmatprep.subr.mxu0 0.0
    %308 = vmatpush1.msra.mxu0 0.0
    %309 = vmatprep.subr.mxu0 0.0
    %310 = vmatpush1.msra.mxu0 0.0
    %311 = vmatprep.subr.mxu0 0.0
    %312 = vmatpush1.msra.mxu0 0.0
    %313 = vmatprep.subr.mxu0 0.0
    %314 = vmatpush1.msra.mxu0 0.0
    %315 = vmatprep.mubr.f32.mxu0 0.0
    %316 = vmatmul.mubr.f32.gmra.mrb[0].mxu0 %v242
    %v317 = vpop.f32.mrb[0].mxu0
    %v318 = vadd.f32 %v233, %v317
    %v319 = vpop.f32.mrb[0].mxu0
    %320 = vmatprep.mubr.f32.mxu0 0.0
    %321 = vmatmul.mubr.f32.gmra.mrb[0].mxu0 %v245
    %v322 = vpop.f32.mrb[0].mxu0
    %v323 = vadd.f32 %v238, %v322
    %v324 = vpop.f32.mrb[0].mxu0
    %325 = vdwg.mxu0
    %v326 = vld [vmem:[#allocation9 + $0x18] sm:$0x1]
    %v327 = vlaneseq
    %v328 = vshrl.u32 %v327, 7
    %v329 = vsub.s32 0, %v328
    %v330 = vrot.slane %v326, %v329
    %v331 = vadd.f32 %v318, %v330
    %v332 = vadd.f32 %v323, %v330
    %v333 = vmax.f32 %v331, 0.0
    %v334 = vmax.f32 %v332, 0.0
    %v335 = vld [vmem:[#allocation9 + $0x20] sm:$0xff]
    %v336 = vld [vmem:[#allocation9 + $0x28] sm:$0xff]
    %v337 = vld [vmem:[#allocation9 + $0x30] sm:$0xff]
    %v338 = vld [vmem:[#allocation9 + $0x38] sm:$0xff]
    %v339 = vld [vmem:[#allocation9 + $0x40] sm:$0xff]
    %v340 = vld [vmem:[#allocation9 + $0x48] sm:$0xff]
    %v341 = vld [vmem:[#allocation9 + $0x50] sm:$0xff]
    %v342 = vld [vmem:[#allocation9 + $0x58] sm:$0xff]
    %v343 = vld [vmem:[#allocation9 + $0x60] sm:$0xff]
    %v344 = vld [vmem:[#allocation9 + $0x68] sm:$0xff]
    %v345 = vld [vmem:[#allocation9 + $0x70] sm:$0xff]
    %v346 = vld [vmem:[#allocation9 + $0x78] sm:$0xff]
    %v347 = vld [vmem:[#allocation9 + $0x80] sm:$0xff]
    %v348 = vld [vmem:[#allocation9 + $0x88] sm:$0xff]
    %v349 = vld [vmem:[#allocation9 + $0x90] sm:$0xff]
    %v350 = vld [vmem:[#allocation9 + $0x98] sm:$0xff]
    %v351 = vld [vmem:[#allocation9 + $0xa0] sm:$0x1]
    %v352 = vlaneseq
    %v353 = vshrl.u32 %v352, 7
    %v354 = vsub.s32 0, %v353
    %v355 = vrot.slane %v351, %v354
    %356 = vmatprep.subr.mxu0 0.0
    %357 = vmatpush1.msra.mxu0 %v335
    %358 = vmatprep.subr.mxu0 0.0
    %359 = vmatpush1.msra.mxu0 %v336
    %360 = vmatprep.subr.mxu0 0.0
    %361 = vmatpush1.msra.mxu0 %v337
    %362 = vmatprep.subr.mxu0 0.0
    %363 = vmatpush1.msra.mxu0 %v338
    %364 = vmatprep.subr.mxu0 0.0
    %365 = vmatpush1.msra.mxu0 %v339
    %366 = vmatprep.subr.mxu0 0.0
    %367 = vmatpush1.msra.mxu0 %v340
    %368 = vmatprep.subr.mxu0 0.0
    %369 = vmatpush1.msra.mxu0 %v341
    %370 = vmatprep.subr.mxu0 0.0
    %371 = vmatpush1.msra.mxu0 %v342
    %372 = vmatprep.subr.mxu0 0.0
    %373 = vmatpush1.msra.mxu0 %v343
    %374 = vmatprep.subr.mxu0 0.0
    %375 = vmatpush1.msra.mxu0 %v344
    %376 = vmatprep.subr.mxu0 0.0
    %377 = vmatpush1.msra.mxu0 %v345
    %378 = vmatprep.subr.mxu0 0.0
    %379 = vmatpush1.msra.mxu0 %v346
    %380 = vmatprep.subr.mxu0 0.0
    %381 = vmatpush1.msra.mxu0 %v347
    %382 = vmatprep.subr.mxu0 0.0
    %383 = vmatpush1.msra.mxu0 %v348
    %384 = vmatprep.subr.mxu0 0.0
    %385 = vmatpush1.msra.mxu0 %v349
    %386 = vmatprep.subr.mxu0 0.0
    %387 = vmatpush1.msra.mxu0 %v350
    %388 = vmatprep.subr.mxu0 0.0
    %389 = vmatpush1.msra.mxu0 0.0
    %390 = vmatprep.subr.mxu0 0.0
    %391 = vmatpush1.msra.mxu0 0.0
    %392 = vmatprep.subr.mxu0 0.0
    %393 = vmatpush1.msra.mxu0 0.0
    %394 = vmatprep.subr.mxu0 0.0
    %395 = vmatpush1.msra.mxu0 0.0
    %396 = vmatprep.subr.mxu0 0.0
    %397 = vmatpush1.msra.mxu0 0.0
    %398 = vmatprep.subr.mxu0 0.0
    %399 = vmatpush1.msra.mxu0 0.0
    %400 = vmatprep.subr.mxu0 0.0
    %401 = vmatpush1.msra.mxu0 0.0
    %402 = vmatprep.subr.mxu0 0.0
    %403 = vmatpush1.msra.mxu0 0.0
    %404 = vmatprep.subr.mxu0 0.0
    %405 = vmatpush1.msra.mxu0 0.0
    %406 = vmatprep.subr.mxu0 0.0
    %407 = vmatpush1.msra.mxu0 0.0
    %408 = vmatprep.subr.mxu0 0.0
    %409 = vmatpush1.msra.mxu0 0.0
    %410 = vmatprep.subr.mxu0 0.0
    %411 = vmatpush1.msra.mxu0 0.0
    %412 = vmatprep.subr.mxu0 0.0
    %413 = vmatpush1.msra.mxu0 0.0
    %414 = vmatprep.subr.mxu0 0.0
    %415 = vmatpush1.msra.mxu0 0.0
    %416 = vmatprep.subr.mxu0 0.0
    %417 = vmatpush1.msra.mxu0 0.0
    %418 = vmatprep.subr.mxu0 0.0
    %419 = vmatpush1.msra.mxu0 0.0
    %420 = vmatprep.mubr.f32.mxu0 0.0
    %421 = vmatmul.mubr.f32.gmra.mrb[0].mxu0 %v333
    %v422 = vpop.f32.mrb[0].mxu0
    %v423 = vadd.f32 %v355, %v422
    %v424 = vpop.f32.mrb[0].mxu0
    %425 = vmatprep.mubr.f32.mxu0 0.0
    %426 = vmatmul.mubr.f32.gmra.mrb[0].mxu0 %v334
    %v427 = vpop.f32.mrb[0].mxu0
    %v428 = vadd.f32 %v355, %v427
    %v429 = vpop.f32.mrb[0].mxu0
    %430 = vdwg.mxu0
    %v431 = vsel %vm82, %v423, -inf
    %432 = vmax.xlane.f32.xlu0 %v431
    %v433 = vpop.xlane.xlu0 %432
    %v434 = vsel %vm82, %v428, -inf
    %435 = vmax.xlane.f32.xlu0 %v434
    %v436 = vpop.xlane.xlu0 %435
    %v437 = vsub.f32 %v423, %v433
    %v438 = vsub.f32 %v428, %v436
    %v439 = vmul.f32 %v437, 1.442695
    %v440 = vpow.pop %v439
    %v441 = vmul.f32 %v438, 1.442695
    %v442 = vpow.pop %v441
    %v443 = vsel %vm82, %v440, 0.0
    %444 = vadd.xlane.f32.xlu0 %v443
    %v445 = vpop.xlane.xlu0 %444
    %v446 = vsel %vm82, %v442, 0.0
    %447 = vadd.xlane.f32.xlu0 %v446
    %v448 = vpop.xlane.xlu0 %447
    %v449 = vrcp.pop %v445
    %v450 = vmul.f32 %v440, %v449
    %v451 = vrcp.pop %v448
    %v452 = vmul.f32 %v442, %v451
    %v453 = vld [vmem:[#allocation2] sm:$0x1]
    %v455 = vlaneseq
    %v456 = vshrl.u32 %v455, 7
    %v457 = vsub.s32 0, %v456
    %v458 = vrot.slane %v453, %v457
    %v460 = vrcp.pop %v458
    %v461 = vmul.f32 %v97, %v460
    %v462 = vmul.f32 %v106, %v460
    %v463 = vmul.f32 %v461, 1.442695
    %v464 = vpow.pop %v463
    %v465 = vmul.f32 %v462, 1.442695
    %v466 = vpow.pop %v465
    %468 = vset.pattern.permute.xlu0 0
    %469 = vperm.xlu0 %468, %v464
    %v470 = vpop.permute.xlu0 %469
    %473 = vset.pattern.permute.xlu0 0
    %474 = vperm.xlu0 %473, %v466
    %v475 = vpop.permute.xlu0 %474
    %v477 = vmul.f32 %v470, %v450
    %v478 = vmul.f32 %v475, %v452
    %v479 = vadd.f32 %v477, 1e-10
    %v480 = vadd.f32 %v478, 1e-10
    %483 = vrot.lane.b32.xlu0 %v450, 2
    %v484 = vpop.permute.xlu0 %483
    %485 = vrot.lane.b32.xlu0 %v452, 2
    %v486 = vpop.permute.xlu0 %485
    %491 = vrot.lane.b32.xlu0 %v479, 14
    %v492 = vpop.permute.xlu0 %491
    %493 = vrot.lane.b32.xlu0 %v480, 14
    %v494 = vpop.permute.xlu0 %493
    %vm497 = vcmask 7168
    %v498 = vsel %vm497, %v97, %v122
    %v499 = vsel %vm497, %v106, %v131
    %vm500 = vcmask 15360
    %v501 = vsel %vm500, %v498, %v484
    %v502 = vsel %vm500, %v499, %v486
    %vm503 = vcmask 113664
    %v504 = vsel %vm503, %v501, %v492
    %v505 = vsel %vm503, %v502, %v494
    %vm506 = vcmask 211968
    %v507 = vsel %vm506, %v504, 0.0
    %v508 = vsel %vm506, %v505, 0.0
    %509 = vst [vmem:[#allocation11] sm:$0xff] %v507
    %510 = vst [vmem:[#allocation11 + $0x8] sm:$0xff] %v508
    // Predicated region
    $region38: #{tpu_custom_call.1} parent=1 // pred_check
      _
    $region39: #{tpu_custom_call.1} parent=1 // pred_check_branch
      %512 = sbr.rel (0) target = $region41
    $region40: #{tpu_custom_call.1} parent=1 // pred_region
      %s514 = ssub.s32 256, 256
      %515 = vsyncadd [#allocation5], %s514
      %s516 = sshll.u32 [#allocation11], 4
      %s517 = int_to_ptr.vmem [resolvable:$true] %s516
      %522 = dma.vmem_to_hbm [thread:$0]  %s517, 256, %s5, [#allocation5], 128, 128, 8
    $region41: #{tpu_custom_call.1} parent=1 // pred_fallthru
      _
    // Predicated region
    $region42: #{tpu_custom_call.1} parent=1 // pred_check
      _
    $region43: #{tpu_custom_call.1} parent=1 // pred_check_branch
      %524 = sbr.rel (0) target = $region45
    $region44: #{tpu_custom_call.1} parent=1 // pred_region
      %525 = dma.done [#allocation5], 256
    $region45: #{tpu_custom_call.1} parent=1 // pred_fallthru
      _
    %526 = vsyncpa [#allocation4], 1
    %527 = vsyncpa [#allocation7], 1
    %528 = vsyncpa [#allocation10], 1
    %529 = vsyncpa [#allocation5], 1

</llo_original>
